<compile_context>
chip_gen: v7x
topology: tpu7x:2x2x1
jax: 0.10.0
libtpu: 0.0.40
codegen_flags: <defaults>
</compile_context>

<pallas_src>
import numpy as np
import jax
import jax.numpy as jnp
from jax.experimental import pallas as pl
from jax.experimental.pallas import tpu as pltpu


def _fc_relu_kernel(x_ref, vt_ref, g_ref, b_ref, o_ref):
    # x_ref : (tm, K)  activation tile
    # vt_ref: (K, N)   weight_norm direction v, pre-transposed (lane axis = out channels)
    # g_ref : (1, N)   weight_norm magnitude per output channel
    # b_ref : (1, N)   bias
    # o_ref : (tm, N)  output tile (lane-dense last dim)
    vt = vt_ref[...]
    # torch weight_norm(dim=0) on a (N, K) Linear weight: per-output-row L2 norm
    # over K.  In the transposed (K, N) layout that is a sublane reduce per column.
    norm = jnp.sqrt(jnp.sum(vt * vt, axis=0, keepdims=True))           # (1, N)
    w = vt * (g_ref[...] / norm)                                       # (K, N) = W_eff^T
    acc = jnp.dot(x_ref[...], w, preferred_element_type=jnp.float32)   # MXU, f32 acc
    acc = acc + b_ref[...]
    o_ref[...] = jnp.maximum(acc, 0.0).astype(o_ref.dtype)


def fc_relu_forward(x, v, g, b, *, block_m=256):
    """Pallas FC_ReLU: relu(x @ (g * v / ||v||_row).T + b).

    x: (..., K) activations
    v: (N, K)   weight_norm direction ("weight_v")
    g: (N,)     weight_norm magnitude ("weight_g")
    b: (N,)     bias
    returns: (..., N)
    """
    K = x.shape[-1]
    N, Kv = v.shape
    assert K == Kv, (K, Kv)
    lead = x.shape[:-1]
    M = int(np.prod(lead)) if lead else 1

    # Layout glue (outside the kernel): flatten leading dims, transpose the weight
    # so the output-channel axis lands on lanes, shape g/b as (1, N) broadcast rows.
    x2 = x.reshape(M, K)
    vt = jnp.transpose(v)                       # (K, N)
    g2 = g.reshape(1, N).astype(x.dtype)
    b2 = b.reshape(1, N).astype(x.dtype)

    # Collapse the grid: one step if the whole batch fits comfortably, otherwise
    # tile rows in large slabs (each slab is a full GEMM against the resident weight).
    tm = M if (M <= block_m or M % block_m != 0) else block_m
    grid = (M // tm,)

    itemsize = jnp.dtype(x.dtype).itemsize
    cost = pl.CostEstimate(
        flops=2 * M * K * N,
        transcendentals=0,
        bytes_accessed=(M * K + K * N + 2 * N + M * N) * itemsize,
    )

    out = pl.pallas_call(
        _fc_relu_kernel,
        out_shape=jax.ShapeDtypeStruct((M, N), x.dtype),
        grid=grid,
        in_specs=[
            pl.BlockSpec((tm, K), lambda i: (i, 0)),   # activations: tiled over rows
            pl.BlockSpec((K, N), lambda i: (0, 0)),    # weight: constant block (stays resident)
            pl.BlockSpec((1, N), lambda i: (0, 0)),    # g
            pl.BlockSpec((1, N), lambda i: (0, 0)),    # bias
        ],
        out_specs=pl.BlockSpec((tm, N), lambda i: (i, 0)),
        compiler_params=pltpu.CompilerParams(
            # Only shard across TensorCores when there is more than one slab;
            # a single tiny step would just pay cross-TC overhead (v7x).
            dimension_semantics=("parallel",) if grid[0] > 1 else ("arbitrary",),
        ),
        cost_estimate=cost,
    )(x2, vt, g2, b2)
    return out.reshape(lead + (N,))


if __name__ == "__main__":
    # Small shapes consistent with the module; channel dims chosen as multiples
    # of 128 so both the GEMM K axis and the output stores are lane-dense.
    batch, seq = 2, 8
    in_ch, out_ch = 128, 128

    key = jax.random.PRNGKey(0)
    kx, kv, kg, kb = jax.random.split(key, 4)
    x = jax.random.normal(kx, (batch, seq, in_ch), dtype=jnp.float32)
    v = jax.random.normal(kv, (out_ch, in_ch), dtype=jnp.float32)
    g = 1.0 + 0.1 * jax.random.normal(kg, (out_ch,), dtype=jnp.float32)
    b = 0.1 * jax.random.normal(kb, (out_ch,), dtype=jnp.float32)

    out = fc_relu_forward(x, v, g, b)
    out = jax.block_until_ready(out)

    # Reference (numpy f32): weight-normalized Linear + ReLU.
    xn, vn, gn, bn = map(np.asarray, (x, v, g, b))
    w_eff = vn * (gn / np.linalg.norm(vn, axis=1))[:, None]            # (N, K)
    ref = np.maximum(xn.reshape(-1, in_ch) @ w_eff.T + bn, 0.0)
    ref = ref.reshape(batch, seq, out_ch)

    assert out.shape == (batch, seq, out_ch), out.shape
    # Tolerance covers possible bf16 MXU passes for f32 matmul at default precision.
    np.testing.assert_allclose(np.asarray(out), ref, rtol=2e-2, atol=1e-1)

    print("KERNEL_OK")
</pallas_src>

<mosaic_0001>
module attributes {stable_mosaic.version = 11 : i64} {
  func.func @_fc_relu_kernel(%arg0: i32, %arg1: memref<16x128xf32, #tpu.memory_space<vmem>>, %arg2: memref<128x128xf32, #tpu.memory_space<vmem>>, %arg3: memref<1x128xf32, #tpu.memory_space<vmem>>, %arg4: memref<1x128xf32, #tpu.memory_space<vmem>>, %arg5: memref<16x128xf32, #tpu.memory_space<vmem>>) attributes {dimension_semantics = [#tpu.dimension_semantics<arbitrary>], iteration_bounds = array<i64: 1>, scalar_prefetch = 0 : i64, scratch_operands = 0 : i64, tpu.core_type = #tpu.core_type<tc>, window_params = [{transform_indices = @transform_0, window_bounds = array<i64: 16, 128>}, {pipeline_mode = #tpu.pipeline_mode<synchronous>, transform_indices = @transform_1, window_bounds = array<i64: 128, 128>}, {pipeline_mode = #tpu.pipeline_mode<synchronous>, transform_indices = @transform_2, window_bounds = array<i64: 1, 128>}, {pipeline_mode = #tpu.pipeline_mode<synchronous>, transform_indices = @transform_3, window_bounds = array<i64: 1, 128>}, {transform_indices = @transform_4, window_bounds = array<i64: 16, 128>}]} {
    %c0 = arith.constant 0 : index
    %c0_0 = arith.constant 0 : index
    %0 = vector.load %arg2[%c0, %c0_0] : memref<128x128xf32, #tpu.memory_space<vmem>>, vector<128x128xf32>
    %1 = arith.mulf %0, %0 : vector<128x128xf32>
    %cst = arith.constant dense<0.000000e+00> : vector<128xf32>
    %2 = vector.multi_reduction <add>, %1, %cst [0] : vector<128x128xf32> to vector<128xf32>
    %3 = vector.shape_cast %2 : vector<128xf32> to vector<1x128xf32>
    %4 = math.sqrt %3 : vector<1x128xf32>
    %c0_1 = arith.constant 0 : index
    %c0_2 = arith.constant 0 : index
    %5 = vector.load %arg3[%c0_1, %c0_2] : memref<1x128xf32, #tpu.memory_space<vmem>>, vector<1x128xf32>
    %6 = arith.divf %5, %4 : vector<1x128xf32>
    %7 = vector.broadcast %6 : vector<1x128xf32> to vector<128x128xf32>
    %8 = arith.mulf %0, %7 : vector<128x128xf32>
    %c0_3 = arith.constant 0 : index
    %c0_4 = arith.constant 0 : index
    %9 = vector.load %arg1[%c0_3, %c0_4] : memref<16x128xf32, #tpu.memory_space<vmem>>, vector<16x128xf32>
    %cst_5 = arith.constant dense<0.000000e+00> : vector<16x128xf32>
    %10 = tpu.matmul %9, %8, %cst_5 {dimension_numbers = #tpu.dot_dimension_numbers<[1], [0], [0], [1], [0, 0, 1, 1], [], []>} : vector<16x128xf32>, vector<128x128xf32>, vector<16x128xf32> -> vector<16x128xf32>
    %c0_6 = arith.constant 0 : index
    %c0_7 = arith.constant 0 : index
    %11 = vector.load %arg4[%c0_6, %c0_7] : memref<1x128xf32, #tpu.memory_space<vmem>>, vector<1x128xf32>
    %12 = vector.broadcast %11 : vector<1x128xf32> to vector<16x128xf32>
    %13 = arith.addf %10, %12 : vector<16x128xf32>
    %cst_8 = arith.constant 0.000000e+00 : f32
    %14 = vector.broadcast %cst_8 : f32 to vector<16x128xf32>
    %15 = arith.maximumf %13, %14 : vector<16x128xf32>
    %c0_9 = arith.constant 0 : index
    %c0_10 = arith.constant 0 : index
    %16 = vector.load %arg5[%c0_9, %c0_10] : memref<16x128xf32, #tpu.memory_space<vmem>>, vector<16x128xf32>
    tpu.vector_store %arg5[%c0_9, %c0_10], %15 {strides = array<i32>} : memref<16x128xf32, #tpu.memory_space<vmem>>, vector<16x128xf32>,
    return
  }
  func.func @transform_0(%arg0: i32) -> (i32, i32) {
    %c0_i32 = arith.constant 0 : i32
    %c0_i32_0 = arith.constant 0 : i32
    return %arg0, %c0_i32 : i32, i32
  }
  func.func @transform_1(%arg0: i32) -> (i32, i32) {
    %c0_i32 = arith.constant 0 : i32
    %c0_i32_0 = arith.constant 0 : i32
    %c0_i32_1 = arith.constant 0 : i32
    return %c0_i32, %c0_i32_0 : i32, i32
  }
  func.func @transform_2(%arg0: i32) -> (i32, i32) {
    %c0_i32 = arith.constant 0 : i32
    %c0_i32_0 = arith.constant 0 : i32
    %c0_i32_1 = arith.constant 0 : i32
    return %c0_i32, %c0_i32_0 : i32, i32
  }
  func.func @transform_3(%arg0: i32) -> (i32, i32) {
    %c0_i32 = arith.constant 0 : i32
    %c0_i32_0 = arith.constant 0 : i32
    %c0_i32_1 = arith.constant 0 : i32
    return %c0_i32, %c0_i32_0 : i32, i32
  }
  func.func @transform_4(%arg0: i32) -> (i32, i32) {
    %c0_i32 = arith.constant 0 : i32
    %c0_i32_0 = arith.constant 0 : i32
    return %arg0, %c0_i32 : i32, i32
  }
}

</mosaic_0001>

<llo_original>
// kernel: tpu_custom_call.1
$region0: #{tpu_custom_call.1}
  #allocation0 [shape = 'u32[]', space=smem, size = 0x4, offset = 0x4, fixed_abs, tag = 'smem constant byte address 0x4 - core index']
  #allocation1 [shape = 'u32[144,128]{1,0:T(1,128)}', space=vmem, size = 0x12000, scoped, tag = 'internal scratch']
  %s0 = inlined_call_operand.hbm [shape: f32[16,128], index: 0, kind: input, shape index: {}]
  %s1 = inlined_call_operand.hbm [shape: f32[128,128], index: 1, kind: input, shape index: {}]
  %s2 = inlined_call_operand.vmem [shape: f32[1,128], index: 2, kind: input, shape index: {}]
  %s3 = inlined_call_operand.vmem [shape: f32[1,128], index: 3, kind: input, shape index: {}]
  %s4 = inlined_call_operand.hbm [shape: f32[16,128], index: 4, kind: output, shape index: {}]
  %s5 = sld [smem:[#allocation0]]
  $region34: #{tpu_custom_call.1} parent=0
    _
  %s7 = ssub.s32 1, %s5
  %s8 = scalar_select 0, %s7, %s5
  $region1: #{tpu_custom_call.1} parent=0
    #allocation2 [shape = 'u8[8192]{0}', space=vmem, size = 0x2000, scoped, tag = 'input window, operand 0, single buffered']
    #allocation3 [shape = 's32[1]{0}', space=sflag, size = 0x4, scoped, tag = 'scoped memory for tpu_custom_call.1']
    #allocation4 [shape = 's32[1]{0}', space=sflag, size = 0x4, scoped, tag = 'scoped memory for tpu_custom_call.1']
    #allocation5 [shape = 'u8[65536]{0}', space=vmem, size = 0x10000, scoped, tag = 'input window, operand 1, single buffered']
    #allocation6 [shape = 's32[1]{0}', space=sflag, size = 0x4, scoped, tag = 'scoped memory for tpu_custom_call.1']
    #allocation7 [shape = 'u8[8192]{0}', space=vmem, size = 0x2000, scoped, tag = 'output window, operand 0, single buffered']
    %9 = vsyncpa [#allocation3], 0
    %10 = vsyncpa [#allocation6], 0
    %11 = vsyncpa [#allocation4], 0
    // Predicated region
    $region2: #{tpu_custom_call.1} parent=1 // pred_check
      _
    $region3: #{tpu_custom_call.1} parent=1 // pred_check_branch
      %13 = sbr.rel (0) target = $region5
    $region4: #{tpu_custom_call.1} parent=1 // pred_region
      %s15 = ssub.s32 256, 256
      %16 = vsyncadd [#allocation3], %s15
      %s17 = sshll.u32 [#allocation2], 4
      %s18 = int_to_ptr.vmem [resolvable:$true] %s17
      %23 = dma.hbm_to_vmem [thread:$0]  %s0, 256, %s18, [#allocation3], 128, 128, 8
    $region5: #{tpu_custom_call.1} parent=1 // pred_fallthru
      _
    // Predicated region
    $region6: #{tpu_custom_call.1} parent=1 // pred_check
      _
    $region7: #{tpu_custom_call.1} parent=1 // pred_check_branch
      %25 = sbr.rel (0) target = $region9
    $region8: #{tpu_custom_call.1} parent=1 // pred_region
      %s27 = ssub.s32 2048, 2048
      %28 = vsyncadd [#allocation6], %s27
      %s29 = sshll.u32 [#allocation5], 4
      %s30 = int_to_ptr.vmem [resolvable:$true] %s29
      %35 = dma.hbm_to_vmem [thread:$0]  %s1, 2048, %s30, [#allocation6], 128, 128, 8
    $region9: #{tpu_custom_call.1} parent=1 // pred_fallthru
      _
    // Predicated region
    $region10: #{tpu_custom_call.1} parent=1 // pred_check
      _
    $region11: #{tpu_custom_call.1} parent=1 // pred_check_branch
      %37 = sbr.rel (0) target = $region13
    $region12: #{tpu_custom_call.1} parent=1 // pred_region
      _
    $region13: #{tpu_custom_call.1} parent=1 // pred_fallthru
      _
    // Predicated region
    $region14: #{tpu_custom_call.1} parent=1 // pred_check
      _
    $region15: #{tpu_custom_call.1} parent=1 // pred_check_branch
      %39 = sbr.rel (0) target = $region17
    $region16: #{tpu_custom_call.1} parent=1 // pred_region
      _
    $region17: #{tpu_custom_call.1} parent=1 // pred_fallthru
      _
    // Predicated region
    $region18: #{tpu_custom_call.1} parent=1 // pred_check
      _
    $region19: #{tpu_custom_call.1} parent=1 // pred_check_branch
      %41 = sbr.rel (0) target = $region21
    $region20: #{tpu_custom_call.1} parent=1 // pred_region
      %42 = dma.done [#allocation3], 256
    $region21: #{tpu_custom_call.1} parent=1 // pred_fallthru
      _
    // Predicated region
    $region22: #{tpu_custom_call.1} parent=1 // pred_check
      _
    $region23: #{tpu_custom_call.1} parent=1 // pred_check_branch
      %44 = sbr.rel (0) target = $region25
    $region24: #{tpu_custom_call.1} parent=1 // pred_region
      %45 = dma.done [#allocation6], 2048
    $region25: #{tpu_custom_call.1} parent=1 // pred_fallthru
      _
    %v46 = vld [vmem:[#allocation5] sm:$0xff]
    %v47 = vld [vmem:[#allocation5 + $0x8] sm:$0xff]
    %v48 = vld [vmem:[#allocation5 + $0x10] sm:$0xff]
    %v49 = vld [vmem:[#allocation5 + $0x18] sm:$0xff]
    %v50 = vld [vmem:[#allocation5 + $0x20] sm:$0xff]
    %v51 = vld [vmem:[#allocation5 + $0x28] sm:$0xff]
    %v52 = vld [vmem:[#allocation5 + $0x30] sm:$0xff]
    %v53 = vld [vmem:[#allocation5 + $0x38] sm:$0xff]
    %v54 = vld [vmem:[#allocation5 + $0x40] sm:$0xff]
    %v55 = vld [vmem:[#allocation5 + $0x48] sm:$0xff]
    %v56 = vld [vmem:[#allocation5 + $0x50] sm:$0xff]
    %v57 = vld [vmem:[#allocation5 + $0x58] sm:$0xff]
    %v58 = vld [vmem:[#allocation5 + $0x60] sm:$0xff]
    %v59 = vld [vmem:[#allocation5 + $0x68] sm:$0xff]
    %v60 = vld [vmem:[#allocation5 + $0x70] sm:$0xff]
    %v61 = vld [vmem:[#allocation5 + $0x78] sm:$0xff]
    %v62 = vmul.f32 %v46, %v46
    %v63 = vmul.f32 %v47, %v47
    %v64 = vmul.f32 %v48, %v48
    %v65 = vmul.f32 %v49, %v49
    %v66 = vmul.f32 %v50, %v50
    %v67 = vmul.f32 %v51, %v51
    %v68 = vmul.f32 %v52, %v52
    %v69 = vmul.f32 %v53, %v53
    %v70 = vmul.f32 %v54, %v54
    %v71 = vmul.f32 %v55, %v55
    %v72 = vmul.f32 %v56, %v56
    %v73 = vmul.f32 %v57, %v57
    %v74 = vmul.f32 %v58, %v58
    %v75 = vmul.f32 %v59, %v59
    %v76 = vmul.f32 %v60, %v60
    %v77 = vmul.f32 %v61, %v61
    %v78 = vadd.f32 %v62, %v63
    %v79 = vadd.f32 %v78, %v64
    %v80 = vadd.f32 %v79, %v65
    %v81 = vadd.f32 %v80, %v66
    %v82 = vadd.f32 %v81, %v67
    %v83 = vadd.f32 %v82, %v68
    %v84 = vadd.f32 %v83, %v69
    %v85 = vadd.f32 %v84, %v70
    %v86 = vadd.f32 %v85, %v71
    %v87 = vadd.f32 %v86, %v72
    %v88 = vadd.f32 %v87, %v73
    %v89 = vadd.f32 %v88, %v74
    %v90 = vadd.f32 %v89, %v75
    %v91 = vadd.f32 %v90, %v76
    %v92 = vadd.f32 %v91, %v77
    %v93 = vrot.slane %v92, 4
    %v94 = vadd.f32 %v92, %v93
    %v95 = vrot.slane %v94, 2
    %v96 = vadd.f32 %v94, %v95
    %v97 = vrot.slane %v96, 1
    %v98 = vadd.f32 %v96, %v97
    %v99 = vrsqrt.pop %v98
    %v100 = vmul.f32 %v98, %v99
    %vm101 = vcmp.eq.f32.partialorder %v98, inf
    %v102 = vsel %vm101, %v98, %v100
    %vm103 = vcmp.eq.f32.partialorder %v98, 0.0
    %v104 = vand.u32 %v98, 2147483648
    %v105 = vsel %vm103, %v104, %v102
    %v106 = vld [vmem:[%s2] sm:$0x1]
    %v107 = vrcp.pop %v105
    %v108 = vmul.f32 %v106, %v107
    %v110 = vlaneseq
    %v111 = vshrl.u32 %v110, 7
    %v112 = vsub.s32 0, %v111
    %v113 = vrot.slane %v108, %v112
    %v115 = vmul.f32 %v46, %v113
    %v116 = vmul.f32 %v47, %v113
    %v117 = vmul.f32 %v48, %v113
    %v118 = vmul.f32 %v49, %v113
    %v119 = vmul.f32 %v50, %v113
    %v120 = vmul.f32 %v51, %v113
    %v121 = vmul.f32 %v52, %v113
    %v122 = vmul.f32 %v53, %v113
    %v123 = vmul.f32 %v54, %v113
    %v124 = vmul.f32 %v55, %v113
    %v125 = vmul.f32 %v56, %v113
    %v126 = vmul.f32 %v57, %v113
    %v127 = vmul.f32 %v58, %v113
    %v128 = vmul.f32 %v59, %v113
    %v129 = vmul.f32 %v60, %v113
    %v130 = vmul.f32 %v61, %v113
    %v131 = vld [vmem:[#allocation2] sm:$0xff]
    %v132 = vld [vmem:[#allocation2 + $0x8] sm:$0xff]
    %v133 = vld [vmem:[%s3] sm:$0x1]
    %v135 = vlaneseq
    %v136 = vshrl.u32 %v135, 7
    %v137 = vsub.s32 0, %v136
    %v138 = vrot.slane %v133, %v137
    %140 = vmatprep.subr.mxu0 0.0
    %141 = vmatpush1.msra.mxu0 %v115
    %142 = vmatprep.subr.mxu0 0.0
    %143 = vmatpush1.msra.mxu0 %v116
    %144 = vmatprep.subr.mxu0 0.0
    %145 = vmatpush1.msra.mxu0 %v117
    %146 = vmatprep.subr.mxu0 0.0
    %147 = vmatpush1.msra.mxu0 %v118
    %148 = vmatprep.subr.mxu0 0.0
    %149 = vmatpush1.msra.mxu0 %v119
    %150 = vmatprep.subr.mxu0 0.0
    %151 = vmatpush1.msra.mxu0 %v120
    %152 = vmatprep.subr.mxu0 0.0
    %153 = vmatpush1.msra.mxu0 %v121
    %154 = vmatprep.subr.mxu0 0.0
    %155 = vmatpush1.msra.mxu0 %v122
    %156 = vmatprep.subr.mxu0 0.0
    %157 = vmatpush1.msra.mxu0 %v123
    %158 = vmatprep.subr.mxu0 0.0
    %159 = vmatpush1.msra.mxu0 %v124
    %160 = vmatprep.subr.mxu0 0.0
    %161 = vmatpush1.msra.mxu0 %v125
    %162 = vmatprep.subr.mxu0 0.0
    %163 = vmatpush1.msra.mxu0 %v126
    %164 = vmatprep.subr.mxu0 0.0
    %165 = vmatpush1.msra.mxu0 %v127
    %166 = vmatprep.subr.mxu0 0.0
    %167 = vmatpush1.msra.mxu0 %v128
    %168 = vmatprep.subr.mxu0 0.0
    %169 = vmatpush1.msra.mxu0 %v129
    %170 = vmatprep.subr.mxu0 0.0
    %171 = vmatpush1.msra.mxu0 %v130
    %172 = vmatprep.subr.mxu0 0.0
    %173 = vmatpush1.msra.mxu0 0.0
    %174 = vmatprep.subr.mxu0 0.0
    %175 = vmatpush1.msra.mxu0 0.0
    %176 = vmatprep.subr.mxu0 0.0
    %177 = vmatpush1.msra.mxu0 0.0
    %178 = vmatprep.subr.mxu0 0.0
    %179 = vmatpush1.msra.mxu0 0.0
    %180 = vmatprep.subr.mxu0 0.0
    %181 = vmatpush1.msra.mxu0 0.0
    %182 = vmatprep.subr.mxu0 0.0
    %183 = vmatpush1.msra.mxu0 0.0
    %184 = vmatprep.subr.mxu0 0.0
    %185 = vmatpush1.msra.mxu0 0.0
    %186 = vmatprep.subr.mxu0 0.0
    %187 = vmatpush1.msra.mxu0 0.0
    %188 = vmatprep.subr.mxu0 0.0
    %189 = vmatpush1.msra.mxu0 0.0
    %190 = vmatprep.subr.mxu0 0.0
    %191 = vmatpush1.msra.mxu0 0.0
    %192 = vmatprep.subr.mxu0 0.0
    %193 = vmatpush1.msra.mxu0 0.0
    %194 = vmatprep.subr.mxu0 0.0
    %195 = vmatpush1.msra.mxu0 0.0
    %196 = vmatprep.subr.mxu0 0.0
    %197 = vmatpush1.msra.mxu0 0.0
    %198 = vmatprep.subr.mxu0 0.0
    %199 = vmatpush1.msra.mxu0 0.0
    %200 = vmatprep.subr.mxu0 0.0
    %201 = vmatpush1.msra.mxu0 0.0
    %202 = vmatprep.subr.mxu0 0.0
    %203 = vmatpush1.msra.mxu0 0.0
    %204 = vmatprep.mubr.f32.mxu0 0.0
    %205 = vmatmul.mubr.f32.gmra.mrb[0].mxu0 %v131
    %v206 = vpop.f32.mrb[0].mxu0
    %v207 = vadd.f32 %v138, %v206
    %v208 = vpop.f32.mrb[0].mxu0
    %209 = vmatprep.mubr.f32.mxu0 0.0
    %210 = vmatmul.mubr.f32.gmra.mrb[0].mxu0 %v132
    %v211 = vpop.f32.mrb[0].mxu0
    %v212 = vadd.f32 %v138, %v211
    %v213 = vpop.f32.mrb[0].mxu0
    %214 = vdwg.mxu0
    %v215 = vmax.f32 %v207, 0.0
    %v216 = vmax.f32 %v212, 0.0
    %217 = vst [vmem:[#allocation7] sm:$0xff] %v215
    %218 = vst [vmem:[#allocation7 + $0x8] sm:$0xff] %v216
    // Predicated region
    $region26: #{tpu_custom_call.1} parent=1 // pred_check
      _
    $region27: #{tpu_custom_call.1} parent=1 // pred_check_branch
      %220 = sbr.rel (0) target = $region29
    $region28: #{tpu_custom_call.1} parent=1 // pred_region
      %s222 = ssub.s32 256, 256
      %223 = vsyncadd [#allocation4], %s222
      %s224 = sshll.u32 [#allocation7], 4
      %s225 = int_to_ptr.vmem [resolvable:$true] %s224
      %230 = dma.vmem_to_hbm [thread:$0]  %s225, 256, %s4, [#allocation4], 128, 128, 8
    $region29: #{tpu_custom_call.1} parent=1 // pred_fallthru
      _
    // Predicated region
    $region30: #{tpu_custom_call.1} parent=1 // pred_check
      _
    $region31: #{tpu_custom_call.1} parent=1 // pred_check_branch
      %232 = sbr.rel (0) target = $region33
    $region32: #{tpu_custom_call.1} parent=1 // pred_region
      %233 = dma.done [#allocation4], 256
    $region33: #{tpu_custom_call.1} parent=1 // pred_fallthru
      _
    %234 = vsyncpa [#allocation3], 1
    %235 = vsyncpa [#allocation6], 1
    %236 = vsyncpa [#allocation4], 1

</llo_original>
